<compile_context>
chip_gen: v6e
topology: v6e:2x2x1
jax: 0.10.0
libtpu: 0.0.40
codegen_flags: <defaults>
</compile_context>

<pallas_src>
import functools

import jax
import jax.numpy as jnp
from jax.experimental import pallas as pl
from jax.experimental.pallas import tpu as pltpu


def _fspecial_gauss_1d(size, sigma):
    """1-D Gaussian window, identical to the PyTorch helper (normalized)."""
    coords = jnp.arange(size, dtype=jnp.float32) - (size // 2)
    g = jnp.exp(-(coords ** 2) / (2.0 * sigma ** 2))
    return g / jnp.sum(g)


def _toeplitz_band(g, n_in, n_out):
    """Banded Toeplitz matrix M (n_in, n_out) with M[j, i] = g[j - i].

    Right-multiplying an (..., n_in) image by M performs a VALID 1-D
    cross-correlation with taps g along that axis (matches F.conv2d).
    """
    ws = g.shape[0]
    j = jnp.arange(n_in)[:, None]
    i = jnp.arange(n_out)[None, :]
    d = j - i
    vals = jnp.take(g, jnp.clip(d, 0, ws - 1))
    return jnp.where((d >= 0) & (d < ws), vals, 0.0).astype(jnp.float32)


def _ssim_kernel(C1, C2, aw_ref, ah_ref, x_ref, y_ref, o_ref, twide_ref):
    """One plane-group (P planes of H x W) per grid step -> one (8,128) tile."""
    P, H, W = x_ref.shape
    Wp = aw_ref.shape[1]
    Hp = ah_ref.shape[0]
    f32 = jnp.float32

    x = x_ref[...].astype(f32).reshape(P * H, W)
    y = y_ref[...].astype(f32).reshape(P * H, W)

    # (opt 1) Stack the five blur inputs for all P planes along the sublane/M
    # axis: the whole W-blur becomes ONE tall MXU matmul (5*P*H, W) @ (W, Wp).
    S = jnp.concatenate([x, y, x * x, y * y, x * y], axis=0)      # (5*P*H, W)
    aw = aw_ref[...]                                              # (W, Wp)
    ah = ah_ref[...]                                              # (Hp, H)
    T = jnp.dot(S.astype(aw.dtype), aw,
                preferred_element_type=f32)                       # (5*P*H, Wp)

    # (opt 2) Lane-pack the 5*P stage-1 results side by side so the H-blur and
    # the element-wise SSIM math run on 5*P*Wp lanes instead of Wp.  Static
    # masked stores into a VMEM scratch — no transpose / relayout op, and no
    # zero padding (so no padded columns evaluating to ssim == 1).
    for i in range(5 * P):
        twide_ref[:, i * Wp:(i + 1) * Wp] = (
            T[i * H:(i + 1) * H, :].astype(twide_ref.dtype))
    U = jnp.dot(ah, twide_ref[...],
                preferred_element_type=f32)                       # (Hp, 5*P*Wp)

    PW = P * Wp
    mu1 = U[:, 0 * PW:1 * PW]
    mu2 = U[:, 1 * PW:2 * PW]
    gxx = U[:, 2 * PW:3 * PW]
    gyy = U[:, 3 * PW:4 * PW]
    gxy = U[:, 4 * PW:5 * PW]

    mu1_sq = mu1 * mu1
    mu2_sq = mu2 * mu2
    mu1_mu2 = mu1 * mu2
    sigma1_sq = gxx - mu1_sq
    sigma2_sq = gyy - mu2_sq
    sigma12 = gxy - mu1_mu2

    # (opt 6) single divide per element instead of two.
    num = (2.0 * mu1_mu2 + C1) * (2.0 * sigma12 + C2)
    den = (mu1_sq + mu2_sq + C1) * (sigma1_sq + sigma2_sq + C2)
    ssim_map = num / den                                          # (Hp, P*Wp)

    # (opt 7) one cross-lane reduction per grid step; every lane is valid.
    group_mean = jnp.sum(ssim_map) * (1.0 / float(P * Hp * Wp))

    # Lane-dense (8, 128) partial-result tile; wrapper reads element [0, 0].
    o_ref[...] = jnp.full(o_ref.shape, group_mean, dtype=jnp.float32)


def _vmem_limit_bytes():
    """~3/4 of physical VMEM (v7x: 64 MiB -> 48 MiB, v5e/v6e: 128 -> 96 MiB)."""
    cap = 64 * 1024 * 1024
    try:
        info = pltpu.get_tpu_info()
        cap = int(getattr(info, "vmem_capacity_bytes", cap) or cap)
    except Exception:
        pass
    return int(min(cap * 3 // 4, 96 * 1024 * 1024))


def _pick_plane_group(n_planes, H, W, Hp, Wp, in_itemsize, budget_bytes,
                      max_planes=16, min_grid_steps=2):
    """Largest divisor P of n_planes whose per-step VMEM footprint fits.

    Counts BOTH inputs x 2 pipeline buffers, the resident Toeplitz operands,
    the lane-packed scratch and the f32 intermediates of the fused
    formulation (stacked S, stage-1 output, blurred maps, element-wise temps).
    """
    f32 = 4

    def step_bytes(p):
        inputs = 2 * 2 * p * H * W * in_itemsize          # X & Y, double-buffered
        toeplitz = 2 * f32 * (W * Wp + Hp * H)            # A_w / A_h (2 bufs worst case)
        temps = f32 * p * (10 * H * W                     # 5 maps + stacked copy S
                           + 10 * H * Wp                  # stage-1 out T + packed scratch
                           + 16 * Hp * Wp)                # U + element-wise temporaries
        return inputs + toeplitz + temps + 2 * f32 * 8 * 128

    best = 1
    for p in range(1, min(n_planes, max_planes) + 1):
        if n_planes % p:
            continue
        if step_bytes(p) > budget_bytes:
            continue
        if p > 1 and n_planes // p < min_grid_steps and n_planes >= min_grid_steps:
            continue   # keep >= 2 grid steps so both v7x TensorCores get work
        best = p
    return best


def ssim_pallas(X, Y, win, *, data_range=1.0, matmul_dtype=jnp.float32):
    """SSIM.forward(X, Y): scalar result (size_average=True, full=False)."""
    if X.ndim != 4:
        raise ValueError("Input images must be a 4-d tensor (N, C, H, W).")
    if X.shape != Y.shape:
        raise ValueError("Input images must have the same dimensions.")
    N, C, H, W = X.shape

    win = jnp.asarray(win, jnp.float32)
    if win.ndim > 1:                       # accept the (C, 1, 1, ws) repeated form
        win = win.reshape(win.shape[0], -1)[0]
    win = win.reshape(-1)
    win_size = int(win.shape[0])
    if H < win_size or W < win_size:
        raise ValueError(f"Image ({H}x{W}) is smaller than the {win_size}-tap window.")

    K1, K2 = 0.01, 0.03
    C1 = (K1 * data_range) ** 2
    C2 = (K2 * data_range) ** 2
    Hp = H - win_size + 1
    Wp = W - win_size + 1

    # Banded Toeplitz matrices realizing the separable VALID Gaussian blur.
    A_w = _toeplitz_band(win, W, Wp).astype(matmul_dtype)      # (W, Wp)
    A_h = _toeplitz_band(win, H, Hp).T.astype(matmul_dtype)    # (Hp, H)

    vmem_limit = _vmem_limit_bytes()
    P = _pick_plane_group(N * C, H, W, Hp, Wp, jnp.dtype(X.dtype).itemsize,
                          budget_bytes=max(vmem_limit - (8 << 20), 8 << 20))
    G = (N * C) // P

    # Collapse batch and channel dims so one grid step packs P planes.
    Xr = X.reshape(N * C, H, W)
    Yr = Y.reshape(N * C, H, W)

    kernel = functools.partial(_ssim_kernel, float(C1), float(C2))

    partials = pl.pallas_call(
        kernel,
        out_shape=jax.ShapeDtypeStruct((G, 8, 128), jnp.float32),
        grid=(G,),
        in_specs=[
            pl.BlockSpec((W, Wp), lambda g: (0, 0)),      # A_w, grid-resident
            pl.BlockSpec((Hp, H), lambda g: (0, 0)),      # A_h, grid-resident
            # If profiling shows the X/Y DMAs exposed at large P, bump these
            # two specs to pipeline_mode=pl.Buffered(3).
            pl.BlockSpec((P, H, W), lambda g: (g, 0, 0)),
            pl.BlockSpec((P, H, W), lambda g: (g, 0, 0)),
        ],
        out_specs=pl.BlockSpec((1, 8, 128), lambda g: (g, 0, 0)),
        scratch_shapes=[pltpu.VMEM((H, 5 * P * Wp), matmul_dtype)],
        compiler_params=pltpu.CompilerParams(
            dimension_semantics=("parallel",),
            vmem_limit_bytes=vmem_limit,
        ),
    )(A_w, A_h, Xr, Yr)

    # Each step wrote the mean of its plane-group's ssim_map; all groups have
    # the same element count (P divides N*C), so the mean of group means
    # equals the PyTorch per-image means followed by the mean over the batch.
    return jnp.mean(partials[:, 0, 0])


# ----------------------------- pure-JAX reference -----------------------------
def _gaussian_filter_ref(img, g):
    N, C, H, W = img.shape
    x = img.reshape(N * C, 1, H, W)
    kx = g.reshape(1, 1, 1, -1)
    ky = g.reshape(1, 1, -1, 1)
    dn = ("NCHW", "OIHW", "NCHW")
    out = jax.lax.conv_general_dilated(x, kx, (1, 1), "VALID", dimension_numbers=dn)
    out = jax.lax.conv_general_dilated(out, ky, (1, 1), "VALID", dimension_numbers=dn)
    return out.reshape(N, C, out.shape[2], out.shape[3])


def ssim_reference(X, Y, win, *, data_range=1.0):
    K1, K2 = 0.01, 0.03
    C1 = (K1 * data_range) ** 2
    C2 = (K2 * data_range) ** 2
    mu1 = _gaussian_filter_ref(X, win)
    mu2 = _gaussian_filter_ref(Y, win)
    mu1_sq, mu2_sq, mu1_mu2 = mu1 * mu1, mu2 * mu2, mu1 * mu2
    sigma1_sq = _gaussian_filter_ref(X * X, win) - mu1_sq
    sigma2_sq = _gaussian_filter_ref(Y * Y, win) - mu2_sq
    sigma12 = _gaussian_filter_ref(X * Y, win) - mu1_mu2
    cs_map = (2 * sigma12 + C2) / (sigma1_sq + sigma2_sq + C2)
    ssim_map = (2 * mu1_mu2 + C1) / (mu1_sq + mu2_sq + C1) * cs_map
    ssim_val = ssim_map.mean(axis=(-1, -2, -3))   # size_average=False path
    return ssim_val.mean()                        # size_average=True in ssim()


if __name__ == "__main__":
    key = jax.random.PRNGKey(0)
    kx, ky = jax.random.split(key)
    N, C, H, W = 2, 4, 16, 16
    X = jax.random.uniform(kx, (N, C, H, W), dtype=jnp.float32)
    Y = jax.random.uniform(ky, (N, C, H, W), dtype=jnp.float32)

    win_size, win_sigma = 11, 1.5
    win = _fspecial_gauss_1d(win_size, win_sigma)   # deterministic "parameter"

    out = ssim_pallas(X, Y, win, data_range=1.0)
    out = jax.block_until_ready(out)

    ref = ssim_reference(X, Y, win, data_range=1.0)
    assert jnp.allclose(out, ref, atol=1e-5, rtol=1e-5), (out, ref)

    print("KERNEL_OK")
</pallas_src>

<mosaic_0001>
module attributes {stable_mosaic.version = 11 : i64} {
  func.func @_ssim_kernel(%arg0: i32, %arg1: memref<16x6xf32, #tpu.memory_space<vmem>>, %arg2: memref<6x16xf32, #tpu.memory_space<vmem>>, %arg3: memref<4x16x16xf32, #tpu.memory_space<vmem>>, %arg4: memref<4x16x16xf32, #tpu.memory_space<vmem>>, %arg5: memref<1x8x128xf32, #tpu.memory_space<vmem>>, %arg6: memref<16x120xf32, #tpu.memory_space<vmem>>) attributes {dimension_semantics = [#tpu.dimension_semantics<parallel>], iteration_bounds = array<i64: 2>, scalar_prefetch = 0 : i64, scratch_operands = 1 : i64, tpu.core_type = #tpu.core_type<tc>, window_params = [{pipeline_mode = #tpu.pipeline_mode<synchronous>, transform_indices = @transform_0, window_bounds = array<i64: 16, 6>}, {pipeline_mode = #tpu.pipeline_mode<synchronous>, transform_indices = @transform_1, window_bounds = array<i64: 6, 16>}, {transform_indices = @transform_2, window_bounds = array<i64: 4, 16, 16>}, {transform_indices = @transform_3, window_bounds = array<i64: 4, 16, 16>}, {transform_indices = @transform_4, window_bounds = array<i64: 1, 8, 128>}]} {
    %c0 = arith.constant 0 : index
    %c0_0 = arith.constant 0 : index
    %c0_1 = arith.constant 0 : index
    %0 = vector.load %arg3[%c0, %c0_0, %c0_1] : memref<4x16x16xf32, #tpu.memory_space<vmem>>, vector<4x16x16xf32>
    %1 = vector.shape_cast %0 : vector<4x16x16xf32> to vector<64x16xf32>
    %c0_2 = arith.constant 0 : index
    %c0_3 = arith.constant 0 : index
    %c0_4 = arith.constant 0 : index
    %2 = vector.load %arg4[%c0_2, %c0_3, %c0_4] : memref<4x16x16xf32, #tpu.memory_space<vmem>>, vector<4x16x16xf32>
    %3 = vector.shape_cast %2 : vector<4x16x16xf32> to vector<64x16xf32>
    %4 = arith.mulf %1, %1 : vector<64x16xf32>
    %5 = arith.mulf %3, %3 : vector<64x16xf32>
    %6 = arith.mulf %1, %3 : vector<64x16xf32>
    %7 = tpu.concatenate %1, %3, %4, %5, %6 in 0 : vector<64x16xf32>, vector<64x16xf32>, vector<64x16xf32>, vector<64x16xf32>, vector<64x16xf32> -> vector<320x16xf32>
    %c0_5 = arith.constant 0 : index
    %c0_6 = arith.constant 0 : index
    %8 = vector.load %arg1[%c0_5, %c0_6] : memref<16x6xf32, #tpu.memory_space<vmem>>, vector<16x6xf32>
    %c0_7 = arith.constant 0 : index
    %c0_8 = arith.constant 0 : index
    %9 = vector.load %arg2[%c0_7, %c0_8] : memref<6x16xf32, #tpu.memory_space<vmem>>, vector<6x16xf32>
    %cst = arith.constant dense<0.000000e+00> : vector<320x6xf32>
    %10 = tpu.matmul %7, %8, %cst {dimension_numbers = #tpu.dot_dimension_numbers<[1], [0], [0], [1], [0, 0, 1, 1], [], []>} : vector<320x16xf32>, vector<16x6xf32>, vector<320x6xf32> -> vector<320x6xf32>
    %11 = vector.extract_strided_slice %10 {offsets = [0, 0], sizes = [16, 6], strides = [1, 1]} : vector<320x6xf32> to vector<16x6xf32>
    %c0_9 = arith.constant 0 : index
    %c0_10 = arith.constant 0 : index
    %12 = vector.load %arg6[%c0_9, %c0_10] : memref<16x120xf32, #tpu.memory_space<vmem>>, vector<16x6xf32>
    tpu.vector_store %arg6[%c0_9, %c0_10], %11 {strides = array<i32>} : memref<16x120xf32, #tpu.memory_space<vmem>>, vector<16x6xf32>,
    %13 = vector.extract_strided_slice %10 {offsets = [16, 0], sizes = [16, 6], strides = [1, 1]} : vector<320x6xf32> to vector<16x6xf32>
    %c0_11 = arith.constant 0 : index
    %c6 = arith.constant 6 : index
    %14 = vector.load %arg6[%c0_11, %c6] : memref<16x120xf32, #tpu.memory_space<vmem>>, vector<16x6xf32>
    tpu.vector_store %arg6[%c0_11, %c6], %13 {strides = array<i32>} : memref<16x120xf32, #tpu.memory_space<vmem>>, vector<16x6xf32>,
    %15 = vector.extract_strided_slice %10 {offsets = [32, 0], sizes = [16, 6], strides = [1, 1]} : vector<320x6xf32> to vector<16x6xf32>
    %c0_12 = arith.constant 0 : index
    %c12 = arith.constant 12 : index
    %16 = vector.load %arg6[%c0_12, %c12] : memref<16x120xf32, #tpu.memory_space<vmem>>, vector<16x6xf32>
    tpu.vector_store %arg6[%c0_12, %c12], %15 {strides = array<i32>} : memref<16x120xf32, #tpu.memory_space<vmem>>, vector<16x6xf32>,
    %17 = vector.extract_strided_slice %10 {offsets = [48, 0], sizes = [16, 6], strides = [1, 1]} : vector<320x6xf32> to vector<16x6xf32>
    %c0_13 = arith.constant 0 : index
    %c18 = arith.constant 18 : index
    %18 = vector.load %arg6[%c0_13, %c18] : memref<16x120xf32, #tpu.memory_space<vmem>>, vector<16x6xf32>
    tpu.vector_store %arg6[%c0_13, %c18], %17 {strides = array<i32>} : memref<16x120xf32, #tpu.memory_space<vmem>>, vector<16x6xf32>,
    %19 = vector.extract_strided_slice %10 {offsets = [64, 0], sizes = [16, 6], strides = [1, 1]} : vector<320x6xf32> to vector<16x6xf32>
    %c0_14 = arith.constant 0 : index
    %c24 = arith.constant 24 : index
    %20 = vector.load %arg6[%c0_14, %c24] : memref<16x120xf32, #tpu.memory_space<vmem>>, vector<16x6xf32>
    tpu.vector_store %arg6[%c0_14, %c24], %19 {strides = array<i32>} : memref<16x120xf32, #tpu.memory_space<vmem>>, vector<16x6xf32>,
    %21 = vector.extract_strided_slice %10 {offsets = [80, 0], sizes = [16, 6], strides = [1, 1]} : vector<320x6xf32> to vector<16x6xf32>
    %c0_15 = arith.constant 0 : index
    %c30 = arith.constant 30 : index
    %22 = vector.load %arg6[%c0_15, %c30] : memref<16x120xf32, #tpu.memory_space<vmem>>, vector<16x6xf32>
    tpu.vector_store %arg6[%c0_15, %c30], %21 {strides = array<i32>} : memref<16x120xf32, #tpu.memory_space<vmem>>, vector<16x6xf32>,
    %23 = vector.extract_strided_slice %10 {offsets = [96, 0], sizes = [16, 6], strides = [1, 1]} : vector<320x6xf32> to vector<16x6xf32>
    %c0_16 = arith.constant 0 : index
    %c36 = arith.constant 36 : index
    %24 = vector.load %arg6[%c0_16, %c36] : memref<16x120xf32, #tpu.memory_space<vmem>>, vector<16x6xf32>
    tpu.vector_store %arg6[%c0_16, %c36], %23 {strides = array<i32>} : memref<16x120xf32, #tpu.memory_space<vmem>>, vector<16x6xf32>,
    %25 = vector.extract_strided_slice %10 {offsets = [112, 0], sizes = [16, 6], strides = [1, 1]} : vector<320x6xf32> to vector<16x6xf32>
    %c0_17 = arith.constant 0 : index
    %c42 = arith.constant 42 : index
    %26 = vector.load %arg6[%c0_17, %c42] : memref<16x120xf32, #tpu.memory_space<vmem>>, vector<16x6xf32>
    tpu.vector_store %arg6[%c0_17, %c42], %25 {strides = array<i32>} : memref<16x120xf32, #tpu.memory_space<vmem>>, vector<16x6xf32>,
    %27 = vector.extract_strided_slice %10 {offsets = [128, 0], sizes = [16, 6], strides = [1, 1]} : vector<320x6xf32> to vector<16x6xf32>
    %c0_18 = arith.constant 0 : index
    %c48 = arith.constant 48 : index
    %28 = vector.load %arg6[%c0_18, %c48] : memref<16x120xf32, #tpu.memory_space<vmem>>, vector<16x6xf32>
    tpu.vector_store %arg6[%c0_18, %c48], %27 {strides = array<i32>} : memref<16x120xf32, #tpu.memory_space<vmem>>, vector<16x6xf32>,
    %29 = vector.extract_strided_slice %10 {offsets = [144, 0], sizes = [16, 6], strides = [1, 1]} : vector<320x6xf32> to vector<16x6xf32>
    %c0_19 = arith.constant 0 : index
    %c54 = arith.constant 54 : index
    %30 = vector.load %arg6[%c0_19, %c54] : memref<16x120xf32, #tpu.memory_space<vmem>>, vector<16x6xf32>
    tpu.vector_store %arg6[%c0_19, %c54], %29 {strides = array<i32>} : memref<16x120xf32, #tpu.memory_space<vmem>>, vector<16x6xf32>,
    %31 = vector.extract_strided_slice %10 {offsets = [160, 0], sizes = [16, 6], strides = [1, 1]} : vector<320x6xf32> to vector<16x6xf32>
    %c0_20 = arith.constant 0 : index
    %c60 = arith.constant 60 : index
    %32 = vector.load %arg6[%c0_20, %c60] : memref<16x120xf32, #tpu.memory_space<vmem>>, vector<16x6xf32>
    tpu.vector_store %arg6[%c0_20, %c60], %31 {strides = array<i32>} : memref<16x120xf32, #tpu.memory_space<vmem>>, vector<16x6xf32>,
    %33 = vector.extract_strided_slice %10 {offsets = [176, 0], sizes = [16, 6], strides = [1, 1]} : vector<320x6xf32> to vector<16x6xf32>
    %c0_21 = arith.constant 0 : index
    %c66 = arith.constant 66 : index
    %34 = vector.load %arg6[%c0_21, %c66] : memref<16x120xf32, #tpu.memory_space<vmem>>, vector<16x6xf32>
    tpu.vector_store %arg6[%c0_21, %c66], %33 {strides = array<i32>} : memref<16x120xf32, #tpu.memory_space<vmem>>, vector<16x6xf32>,
    %35 = vector.extract_strided_slice %10 {offsets = [192, 0], sizes = [16, 6], strides = [1, 1]} : vector<320x6xf32> to vector<16x6xf32>
    %c0_22 = arith.constant 0 : index
    %c72 = arith.constant 72 : index
    %36 = vector.load %arg6[%c0_22, %c72] : memref<16x120xf32, #tpu.memory_space<vmem>>, vector<16x6xf32>
    tpu.vector_store %arg6[%c0_22, %c72], %35 {strides = array<i32>} : memref<16x120xf32, #tpu.memory_space<vmem>>, vector<16x6xf32>,
    %37 = vector.extract_strided_slice %10 {offsets = [208, 0], sizes = [16, 6], strides = [1, 1]} : vector<320x6xf32> to vector<16x6xf32>
    %c0_23 = arith.constant 0 : index
    %c78 = arith.constant 78 : index
    %38 = vector.load %arg6[%c0_23, %c78] : memref<16x120xf32, #tpu.memory_space<vmem>>, vector<16x6xf32>
    tpu.vector_store %arg6[%c0_23, %c78], %37 {strides = array<i32>} : memref<16x120xf32, #tpu.memory_space<vmem>>, vector<16x6xf32>,
    %39 = vector.extract_strided_slice %10 {offsets = [224, 0], sizes = [16, 6], strides = [1, 1]} : vector<320x6xf32> to vector<16x6xf32>
    %c0_24 = arith.constant 0 : index
    %c84 = arith.constant 84 : index
    %40 = vector.load %arg6[%c0_24, %c84] : memref<16x120xf32, #tpu.memory_space<vmem>>, vector<16x6xf32>
    tpu.vector_store %arg6[%c0_24, %c84], %39 {strides = array<i32>} : memref<16x120xf32, #tpu.memory_space<vmem>>, vector<16x6xf32>,
    %41 = vector.extract_strided_slice %10 {offsets = [240, 0], sizes = [16, 6], strides = [1, 1]} : vector<320x6xf32> to vector<16x6xf32>
    %c0_25 = arith.constant 0 : index
    %c90 = arith.constant 90 : index
    %42 = vector.load %arg6[%c0_25, %c90] : memref<16x120xf32, #tpu.memory_space<vmem>>, vector<16x6xf32>
    tpu.vector_store %arg6[%c0_25, %c90], %41 {strides = array<i32>} : memref<16x120xf32, #tpu.memory_space<vmem>>, vector<16x6xf32>,
    %43 = vector.extract_strided_slice %10 {offsets = [256, 0], sizes = [16, 6], strides = [1, 1]} : vector<320x6xf32> to vector<16x6xf32>
    %c0_26 = arith.constant 0 : index
    %c96 = arith.constant 96 : index
    %44 = vector.load %arg6[%c0_26, %c96] : memref<16x120xf32, #tpu.memory_space<vmem>>, vector<16x6xf32>
    tpu.vector_store %arg6[%c0_26, %c96], %43 {strides = array<i32>} : memref<16x120xf32, #tpu.memory_space<vmem>>, vector<16x6xf32>,
    %45 = vector.extract_strided_slice %10 {offsets = [272, 0], sizes = [16, 6], strides = [1, 1]} : vector<320x6xf32> to vector<16x6xf32>
    %c0_27 = arith.constant 0 : index
    %c102 = arith.constant 102 : index
    %46 = vector.load %arg6[%c0_27, %c102] : memref<16x120xf32, #tpu.memory_space<vmem>>, vector<16x6xf32>
    tpu.vector_store %arg6[%c0_27, %c102], %45 {strides = array<i32>} : memref<16x120xf32, #tpu.memory_space<vmem>>, vector<16x6xf32>,
    %47 = vector.extract_strided_slice %10 {offsets = [288, 0], sizes = [16, 6], strides = [1, 1]} : vector<320x6xf32> to vector<16x6xf32>
    %c0_28 = arith.constant 0 : index
    %c108 = arith.constant 108 : index
    %48 = vector.load %arg6[%c0_28, %c108] : memref<16x120xf32, #tpu.memory_space<vmem>>, vector<16x6xf32>
    tpu.vector_store %arg6[%c0_28, %c108], %47 {strides = array<i32>} : memref<16x120xf32, #tpu.memory_space<vmem>>, vector<16x6xf32>,
    %49 = vector.extract_strided_slice %10 {offsets = [304, 0], sizes = [16, 6], strides = [1, 1]} : vector<320x6xf32> to vector<16x6xf32>
    %c0_29 = arith.constant 0 : index
    %c114 = arith.constant 114 : index
    %50 = vector.load %arg6[%c0_29, %c114] : memref<16x120xf32, #tpu.memory_space<vmem>>, vector<16x6xf32>
    tpu.vector_store %arg6[%c0_29, %c114], %49 {strides = array<i32>} : memref<16x120xf32, #tpu.memory_space<vmem>>, vector<16x6xf32>,
    %c0_30 = arith.constant 0 : index
    %c0_31 = arith.constant 0 : index
    %51 = vector.load %arg6[%c0_30, %c0_31] : memref<16x120xf32, #tpu.memory_space<vmem>>, vector<16x120xf32>
    %cst_32 = arith.constant dense<0.000000e+00> : vector<6x120xf32>
    %52 = tpu.matmul %9, %51, %cst_32 {dimension_numbers = #tpu.dot_dimension_numbers<[1], [0], [0], [1], [0, 0, 1, 1], [], []>} : vector<6x16xf32>, vector<16x120xf32>, vector<6x120xf32> -> vector<6x120xf32>
    %53 = vector.extract_strided_slice %52 {offsets = [0, 0], sizes = [6, 24], strides = [1, 1]} : vector<6x120xf32> to vector<6x24xf32>
    %54 = vector.extract_strided_slice %52 {offsets = [0, 24], sizes = [6, 24], strides = [1, 1]} : vector<6x120xf32> to vector<6x24xf32>
    %55 = vector.extract_strided_slice %52 {offsets = [0, 48], sizes = [6, 24], strides = [1, 1]} : vector<6x120xf32> to vector<6x24xf32>
    %56 = vector.extract_strided_slice %52 {offsets = [0, 72], sizes = [6, 24], strides = [1, 1]} : vector<6x120xf32> to vector<6x24xf32>
    %57 = vector.extract_strided_slice %52 {offsets = [0, 96], sizes = [6, 24], strides = [1, 1]} : vector<6x120xf32> to vector<6x24xf32>
    %58 = arith.mulf %53, %53 : vector<6x24xf32>
    %59 = arith.mulf %54, %54 : vector<6x24xf32>
    %60 = arith.mulf %53, %54 : vector<6x24xf32>
    %61 = arith.subf %55, %58 : vector<6x24xf32>
    %62 = arith.subf %56, %59 : vector<6x24xf32>
    %63 = arith.subf %57, %60 : vector<6x24xf32>
    %cst_33 = arith.constant 2.000000e+00 : f32
    %64 = vector.broadcast %cst_33 : f32 to vector<6x24xf32>
    %65 = arith.mulf %64, %60 : vector<6x24xf32>
    %cst_34 = arith.constant 9.99999974E-5 : f32
    %66 = vector.broadcast %cst_34 : f32 to vector<6x24xf32>
    %67 = arith.addf %65, %66 : vector<6x24xf32>
    %cst_35 = arith.constant 2.000000e+00 : f32
    %68 = vector.broadcast %cst_35 : f32 to vector<6x24xf32>
    %69 = arith.mulf %68, %63 : vector<6x24xf32>
    %cst_36 = arith.constant 8.99999984E-4 : f32
    %70 = vector.broadcast %cst_36 : f32 to vector<6x24xf32>
    %71 = arith.addf %69, %70 : vector<6x24xf32>
    %72 = arith.mulf %67, %71 : vector<6x24xf32>
    %73 = arith.addf %58, %59 : vector<6x24xf32>
    %cst_37 = arith.constant 9.99999974E-5 : f32
    %74 = vector.broadcast %cst_37 : f32 to vector<6x24xf32>
    %75 = arith.addf %73, %74 : vector<6x24xf32>
    %76 = arith.addf %61, %62 : vector<6x24xf32>
    %cst_38 = arith.constant 8.99999984E-4 : f32
    %77 = vector.broadcast %cst_38 : f32 to vector<6x24xf32>
    %78 = arith.addf %76, %77 : vector<6x24xf32>
    %79 = arith.mulf %75, %78 : vector<6x24xf32>
    %80 = arith.divf %72, %79 : vector<6x24xf32>
    %81 = vector.shape_cast %80 : vector<6x24xf32> to vector<1x6x24xf32>
    %cst_39 = arith.constant dense<0.000000e+00> : vector<1xf32>
    %82 = vector.multi_reduction <add>, %81, %cst_39 [1, 2] : vector<1x6x24xf32> to vector<1xf32>
    %83 = vector.shape_cast %82 : vector<1xf32> to vector<1x1x1xf32>
    %84 = vector.extract %83[0, 0, 0] : f32 from vector<1x1x1xf32>
    %cst_40 = arith.constant 0.0069444445 : f32
    %85 = arith.mulf %84, %cst_40 : f32
    %86 = vector.broadcast %85 : f32 to vector<1x8x128xf32>
    %c0_41 = arith.constant 0 : index
    %c0_42 = arith.constant 0 : index
    %c0_43 = arith.constant 0 : index
    %87 = vector.load %arg5[%c0_41, %c0_42, %c0_43] : memref<1x8x128xf32, #tpu.memory_space<vmem>>, vector<1x8x128xf32>
    tpu.vector_store %arg5[%c0_41, %c0_42, %c0_43], %86 {strides = array<i32>} : memref<1x8x128xf32, #tpu.memory_space<vmem>>, vector<1x8x128xf32>,
    return
  }
  func.func @transform_0(%arg0: i32) -> (i32, i32) {
    %c0_i32 = arith.constant 0 : i32
    %c0_i32_0 = arith.constant 0 : i32
    %c0_i32_1 = arith.constant 0 : i32
    return %c0_i32, %c0_i32_0 : i32, i32
  }
  func.func @transform_1(%arg0: i32) -> (i32, i32) {
    %c0_i32 = arith.constant 0 : i32
    %c0_i32_0 = arith.constant 0 : i32
    %c0_i32_1 = arith.constant 0 : i32
    return %c0_i32, %c0_i32_0 : i32, i32
  }
  func.func @transform_2(%arg0: i32) -> (i32, i32, i32) {
    %c0_i32 = arith.constant 0 : i32
    %c0_i32_0 = arith.constant 0 : i32
    %c0_i32_1 = arith.constant 0 : i32
    return %arg0, %c0_i32, %c0_i32_0 : i32, i32, i32
  }
  func.func @transform_3(%arg0: i32) -> (i32, i32, i32) {
    %c0_i32 = arith.constant 0 : i32
    %c0_i32_0 = arith.constant 0 : i32
    %c0_i32_1 = arith.constant 0 : i32
    return %arg0, %c0_i32, %c0_i32_0 : i32, i32, i32
  }
  func.func @transform_4(%arg0: i32) -> (i32, i32, i32) {
    %c0_i32 = arith.constant 0 : i32
    %c0_i32_0 = arith.constant 0 : i32
    %c0_i32_1 = arith.constant 0 : i32
    return %arg0, %c0_i32, %c0_i32_0 : i32, i32, i32
  }
}

</mosaic_0001>

<llo_original>
// kernel: tpu_custom_call.1
$region0: #{tpu_custom_call.1}
  #allocation0 [shape = 'u32[]', space=smem, size = 0x4, offset = 0x4, fixed_abs, tag = 'smem constant byte address 0x4 - core index']
  #allocation1 [shape = 'u32[144,128]{1,0:T(1,128)}', space=vmem, size = 0x12000, scoped, tag = 'internal scratch']
  #allocation2 [shape = 'f32[16,120]{1,0:T(8,128)}', space=vmem, size = 0x2000, scoped, tag = 'scratch operand']
  %s0 = inlined_call_operand.vmem [shape: f32[16,6], index: 0, kind: input, shape index: {}]
  %s1 = inlined_call_operand.vmem [shape: f32[6,16], index: 1, kind: input, shape index: {}]
  %s2 = inlined_call_operand.hbm [shape: f32[8,16,16], index: 2, kind: input, shape index: {}]
  %s3 = inlined_call_operand.hbm [shape: f32[8,16,16], index: 3, kind: input, shape index: {}]
  %s4 = inlined_call_operand.hbm [shape: f32[2,8,128], index: 4, kind: output, shape index: {}]
  %s5 = sld [smem:[#allocation0]]
  $region57: #{tpu_custom_call.1} parent=0
    _
  %s7 = ssub.s32 1, %s5
  %s8 = scalar_select 0, %s7, %s5
  $region1: #{tpu_custom_call.1} parent=0
    #allocation3 [shape = 'u8[65536]{0}', space=vmem, size = 0x10000, scoped, tag = 'input window, operand 2']
    #allocation4 [shape = 's32[2]{0}', space=sflag, size = 0x8, scoped, tag = 'scoped memory for tpu_custom_call.1']
    #allocation5 [shape = 's32[2]{0}', space=sflag, size = 0x8, scoped, tag = 'scoped memory for tpu_custom_call.1']
    #allocation6 [shape = 'u8[65536]{0}', space=vmem, size = 0x10000, scoped, tag = 'input window, operand 3']
    #allocation7 [shape = 's32[2]{0}', space=sflag, size = 0x8, scoped, tag = 'scoped memory for tpu_custom_call.1']
    #allocation8 [shape = 'u8[8192]{0}', space=vmem, size = 0x2000, scoped, tag = 'output window, operand 0']
    %9 = vsyncpa [#allocation4], 0
    %s10 = scalar_lea.sflag [#allocation4], 1
    %11 = vsyncpa %s10, 0
    %12 = vsyncpa [#allocation7], 0
    %s13 = scalar_lea.sflag [#allocation7], 1
    %14 = vsyncpa %s13, 0
    %15 = vsyncpa [#allocation5], 0
    %s16 = scalar_lea.sflag [#allocation5], 1
    %17 = vsyncpa %s16, 0
    loop: start=0, step=1, limit=4
    $region2: #{tpu_custom_call.1} parent=1 // loop_pre_header
      _
    $region3: #{tpu_custom_call.1} parent=1 // loop_header
      %s19 = sphi 0, %s23
      %p20 = scmp.ge.s32.totalorder %s19, 4
      %s27 = sphi 0, %s27
      %s29 = sphi 0, %s27
      %s30 = sphi 0, %s29
      %s44 = sphi 0, %s30
      %s48 = sphi 0, %s48
      %s50 = sphi 0, %s48
      %s51 = sphi 0, %s50
      %s65 = sphi 0, %s51
      %s71 = sphi 0, %s73
      %s74 = sphi 0, %s71
      %s75 = sphi 0, %s74
      %s91 = sphi 0, %s75
      %s97 = sphi 0, %s99
      %s100 = sphi 0, %s97
      %s101 = sphi 0, %s100
      %s117 = sphi 0, %s101
      %s123 = sphi 0, %s125
      %s126 = sphi 0, %s123
      %s127 = sphi 0, %s126
      %s143 = sphi 0, %s127
    $region4: #{tpu_custom_call.1} parent=1 // loop_header_branch
      %22 = sbr.rel (%p20) target = $region8
    $region5: #{tpu_custom_call.1} parent=1 // loop_body
      %s24 = ssub.s32 %s19, 1
      %s25 = ssub.s32 %s19, 2
      %s26 = sadd.s32 %s19, 1
      %s28 = sadd.s32 %s27, 1
      %p31 = scmp.eq.s32.totalorder %s19, 1
      %p32 = scmp.ne.s32.totalorder %s27, %s29
      %p33 = scmp.eq.s32.totalorder %s19, 0
      %p34 = por %p32, %p33
      %p35 = scmp.ne.s32.totalorder %s27, %s29
      %p36 = scmp.eq.s32.totalorder %s24, 1
      %p37 = por %p35, %p36
      %p38 = scmp.ne.s32.totalorder %s29, %s30
      %p39 = scmp.eq.s32.totalorder %s24, 0
      %p40 = por %p38, %p39
      %p41 = scmp.ne.s32.totalorder %s29, %s30
      %p42 = scmp.eq.s32.totalorder %s25, 1
      %p43 = por %p41, %p42
      %p45 = scmp.ne.s32.totalorder %s30, %s44
      %p46 = scmp.eq.s32.totalorder %s25, 0
      %p47 = por %p45, %p46
      %s49 = sadd.s32 %s48, 1
      %p52 = scmp.eq.s32.totalorder %s19, 1
      %p53 = scmp.ne.s32.totalorder %s48, %s50
      %p54 = scmp.eq.s32.totalorder %s19, 0
      %p55 = por %p53, %p54
      %p56 = scmp.ne.s32.totalorder %s48, %s50
      %p57 = scmp.eq.s32.totalorder %s24, 1
      %p58 = por %p56, %p57
      %p59 = scmp.ne.s32.totalorder %s50, %s51
      %p60 = scmp.eq.s32.totalorder %s24, 0
      %p61 = por %p59, %p60
      %p62 = scmp.ne.s32.totalorder %s50, %s51
      %p63 = scmp.eq.s32.totalorder %s25, 1
      %p64 = por %p62, %p63
      %p66 = scmp.ne.s32.totalorder %s51, %s65
      %p67 = scmp.eq.s32.totalorder %s25, 0
      %p68 = por %p66, %p67
      %s69 = ssub.s32 %s19, %s26
      %p70 = scmp.eq.s32.totalorder %s69, 0
      %s72 = sadd.s32 %s71, 1
      %s73 = scalar_select %p70, %s71, %s72
      %p76 = pneg %p70
      %p77 = scmp.eq.s32.totalorder %s19, 1
      %p78 = por %p76, %p77
      %p79 = scmp.ne.s32.totalorder %s71, %s74
      %p80 = scmp.eq.s32.totalorder %s19, 0
      %p81 = por %p79, %p80
      %p82 = scmp.ne.s32.totalorder %s71, %s74
      %p83 = scmp.eq.s32.totalorder %s24, 1
      %p84 = por %p82, %p83
      %p85 = scmp.ne.s32.totalorder %s74, %s75
      %p86 = scmp.eq.s32.totalorder %s24, 0
      %p87 = por %p85, %p86
      %p88 = scmp.ne.s32.totalorder %s74, %s75
      %p89 = scmp.eq.s32.totalorder %s25, 1
      %p90 = por %p88, %p89
      %p92 = scmp.ne.s32.totalorder %s75, %s91
      %p93 = scmp.eq.s32.totalorder %s25, 0
      %p94 = por %p92, %p93
      %s95 = ssub.s32 %s19, %s26
      %p96 = scmp.eq.s32.totalorder %s95, 0
      %s98 = sadd.s32 %s97, 1
      %s99 = scalar_select %p96, %s97, %s98
      %p102 = pneg %p96
      %p103 = scmp.eq.s32.totalorder %s19, 1
      %p104 = por %p102, %p103
      %p105 = scmp.ne.s32.totalorder %s97, %s100
      %p106 = scmp.eq.s32.totalorder %s19, 0
      %p107 = por %p105, %p106
      %p108 = scmp.ne.s32.totalorder %s97, %s100
      %p109 = scmp.eq.s32.totalorder %s24, 1
      %p110 = por %p108, %p109
      %p111 = scmp.ne.s32.totalorder %s100, %s101
      %p112 = scmp.eq.s32.totalorder %s24, 0
      %p113 = por %p111, %p112
      %p114 = scmp.ne.s32.totalorder %s100, %s101
      %p115 = scmp.eq.s32.totalorder %s25, 1
      %p116 = por %p114, %p115
      %p118 = scmp.ne.s32.totalorder %s101, %s117
      %p119 = scmp.eq.s32.totalorder %s25, 0
      %p120 = por %p118, %p119
      %s121 = ssub.s32 %s19, %s26
      %p122 = scmp.eq.s32.totalorder %s121, 0
      %s124 = sadd.s32 %s123, 1
      %s125 = scalar_select %p122, %s123, %s124
      %p128 = pneg %p122
      %p129 = scmp.eq.s32.totalorder %s19, 1
      %p130 = por %p128, %p129
      %p131 = scmp.ne.s32.totalorder %s123, %s126
      %p132 = scmp.eq.s32.totalorder %s19, 0
      %p133 = por %p131, %p132
      %p134 = scmp.ne.s32.totalorder %s123, %s126
      %p135 = scmp.eq.s32.totalorder %s24, 1
      %p136 = por %p134, %p135
      %p137 = scmp.ne.s32.totalorder %s126, %s127
      %p138 = scmp.eq.s32.totalorder %s24, 0
      %p139 = por %p137, %p138
      %p140 = scmp.ne.s32.totalorder %s126, %s127
      %p141 = scmp.eq.s32.totalorder %s25, 1
      %p142 = por %p140, %p141
      %p144 = scmp.ne.s32.totalorder %s127, %s143
      %p145 = scmp.eq.s32.totalorder %s25, 0
      %p146 = por %p144, %p145
      %p147 = scmp.le.s32.totalorder 1, %s19
      %p148 = scmp.lt.s32.totalorder %s19, 3
      %p149 = pnand %p147, %p148
      %p150 = pneg %p149
      // Predicated region
      $region9: #{tpu_custom_call.1} parent=5 // pred_check
        _
      $region10: #{tpu_custom_call.1} parent=5 // pred_check_branch
        %152 = sbr.rel (%p149) target = $region12
      $region11: #{tpu_custom_call.1} parent=5 // pred_region
        %s153 = ssub.s32 %s19, 1
        // Predicated region
        $region13: #{tpu_custom_call.1} parent=11 // pred_check
          %p154 = pneg %p40
        $region14: #{tpu_custom_call.1} parent=11 // pred_check_branch
          %156 = sbr.rel (%p154) target = $region16
        $region15: #{tpu_custom_call.1} parent=11 // pred_region
          _
        $region16: #{tpu_custom_call.1} parent=11 // pred_fallthru
          _
        // Predicated region
        $region17: #{tpu_custom_call.1} parent=11 // pred_check
          %p157 = pneg %p61
        $region18: #{tpu_custom_call.1} parent=11 // pred_check_branch
          %159 = sbr.rel (%p157) target = $region20
        $region19: #{tpu_custom_call.1} parent=11 // pred_region
          _
        $region20: #{tpu_custom_call.1} parent=11 // pred_fallthru
          _
      $region12: #{tpu_custom_call.1} parent=5 // pred_fallthru
        _
      %p160 = scmp.lt.s32.totalorder %s19, 2
      // Predicated region
      $region21: #{tpu_custom_call.1} parent=5 // pred_check
        %p161 = pneg %p160
      $region22: #{tpu_custom_call.1} parent=5 // pred_check_branch
        %163 = sbr.rel (%p161) target = $region24
      $region23: #{tpu_custom_call.1} parent=5 // pred_region
        // Predicated region
        $region25: #{tpu_custom_call.1} parent=23 // pred_check
          %p164 = pneg %p81
        $region26: #{tpu_custom_call.1} parent=23 // pred_check_branch
          %166 = sbr.rel (%p164) target = $region28
        $region27: #{tpu_custom_call.1} parent=23 // pred_region
          %s167 = sand.u32 %s71, 1
          %s168 = scalar_lea.sflag [#allocation4], %s167
          %s169 = sand.u32 %s71, 1
          %s170 = smul.addr %s169, 64
          %s171 = scalar_lea.vmem [#allocation3], %s170
          %s172 = smul.u32 4, %s19
          %s174 = ssub.s32 1024, 1024
          %175 = vsyncadd %s168, %s174
          %s176 = smul.addr %s172, 2
          %s177 = smul.addr %s176, 128
          %s178 = scalar_lea.hbm %s2, %s177
          %s179 = sshll.u32 %s171, 4
          %s180 = int_to_ptr.vmem [resolvable:$true] %s179
          %185 = dma.hbm_to_vmem [thread:$0]  %s178, 1024, %s180, %s168, 128, 128, 8
        $region28: #{tpu_custom_call.1} parent=23 // pred_fallthru
          _
        // Predicated region
        $region29: #{tpu_custom_call.1} parent=23 // pred_check
          %p186 = pneg %p107
        $region30: #{tpu_custom_call.1} parent=23 // pred_check_branch
          %188 = sbr.rel (%p186) target = $region32
        $region31: #{tpu_custom_call.1} parent=23 // pred_region
          %s189 = sand.u32 %s97, 1
          %s190 = scalar_lea.sflag [#allocation7], %s189
          %s191 = sand.u32 %s97, 1
          %s192 = smul.addr %s191, 64
          %s193 = scalar_lea.vmem [#allocation6], %s192
          %s194 = smul.u32 4, %s19
          %s196 = ssub.s32 1024, 1024
          %197 = vsyncadd %s190, %s196
          %s198 = smul.addr %s194, 2
          %s199 = smul.addr %s198, 128
          %s200 = scalar_lea.hbm %s3, %s199
          %s201 = sshll.u32 %s193, 4
          %s202 = int_to_ptr.vmem [resolvable:$true] %s201
          %207 = dma.hbm_to_vmem [thread:$0]  %s200, 1024, %s202, %s190, 128, 128, 8
        $region32: #{tpu_custom_call.1} parent=23 // pred_fallthru
          _
      $region24: #{tpu_custom_call.1} parent=5 // pred_fallthru
        _
      %p208 = scmp.le.s32.totalorder 1, %s19
      %p209 = scmp.lt.s32.totalorder %s19, 3
      %p210 = pnand %p208, %p209
      %p211 = pneg %p210
      // Predicated region
      $region33: #{tpu_custom_call.1} parent=5 // pred_check
        _
      $region34: #{tpu_custom_call.1} parent=5 // pred_check_branch
        %213 = sbr.rel (%p210) target = $region36
      $region35: #{tpu_custom_call.1} parent=5 // pred_region
        %s214 = ssub.s32 %s19, 1
        %s215 = sand.u32 %s74, 1
        %s216 = scalar_lea.sflag [#allocation4], %s215
        %s217 = sand.u32 %s74, 1
        %s218 = smul.addr %s217, 64
        %s219 = scalar_lea.vmem [#allocation3], %s218
        // Predicated region
        $region37: #{tpu_custom_call.1} parent=35 // pred_check
          %p220 = pneg %p87
        $region38: #{tpu_custom_call.1} parent=35 // pred_check_branch
          %222 = sbr.rel (%p220) target = $region40
        $region39: #{tpu_custom_call.1} parent=35 // pred_region
          %223 = dma.done %s216, 1024
        $region40: #{tpu_custom_call.1} parent=35 // pred_fallthru
          _
        %s224 = sand.u32 %s100, 1
        %s225 = scalar_lea.sflag [#allocation7], %s224
        %s226 = sand.u32 %s100, 1
        %s227 = smul.addr %s226, 64
        %s228 = scalar_lea.vmem [#allocation6], %s227
        // Predicated region
        $region41: #{tpu_custom_call.1} parent=35 // pred_check
          %p229 = pneg %p113
        $region42: #{tpu_custom_call.1} parent=35 // pred_check_branch
          %231 = sbr.rel (%p229) target = $region44
        $region43: #{tpu_custom_call.1} parent=35 // pred_region
          %232 = dma.done %s225, 1024
        $region44: #{tpu_custom_call.1} parent=35 // pred_fallthru
          _
        %p233 = pneg %p40
        %p234 = pneg %p37
        %p235 = pneg %p61
        %p236 = pneg %p58
        %s237 = sand.u32 %s74, 1
        %s238 = scalar_lea.sflag [#allocation4], %s237
        %s239 = sand.u32 %s74, 1
        %s240 = smul.addr %s239, 64
        %s241 = scalar_lea.vmem [#allocation3], %s240
        %p242 = pneg %p87
        %p243 = pneg %p84
        %s244 = sand.u32 %s100, 1
        %s245 = scalar_lea.sflag [#allocation7], %s244
        %s246 = sand.u32 %s100, 1
        %s247 = smul.addr %s246, 64
        %s248 = scalar_lea.vmem [#allocation6], %s247
        %p249 = pneg %p113
        %p250 = pneg %p110
        %p251 = pneg %p139
        %p252 = pneg %p136
        %s253 = sand.u32 %s126, 1
        %s254 = scalar_lea.sflag [#allocation5], %s253
        %s255 = sand.u32 %s126, 1
        %s256 = smul.addr %s255, 8
        %s257 = scalar_lea.vmem [#allocation8], %s256
        %s258 = smul.u32 4, %s24
        %s259 = smul.u32 4, %s24
        %v260 = vld [vmem:[%s219] sm:$0xff]
        %v261 = vld [vmem:[%s219 + $0x8] sm:$0xff]
        %v262 = vld [vmem:[%s219 + $0x10] sm:$0xff]
        %v263 = vld [vmem:[%s219 + $0x18] sm:$0xff]
        %v264 = vld [vmem:[%s219 + $0x20] sm:$0xff]
        %v265 = vld [vmem:[%s219 + $0x28] sm:$0xff]
        %v266 = vld [vmem:[%s219 + $0x30] sm:$0xff]
        %v267 = vld [vmem:[%s219 + $0x38] sm:$0xff]
        %v268 = vld [vmem:[%s228] sm:$0xff]
        %v269 = vld [vmem:[%s228 + $0x8] sm:$0xff]
        %v270 = vld [vmem:[%s228 + $0x10] sm:$0xff]
        %v271 = vld [vmem:[%s228 + $0x18] sm:$0xff]
        %v272 = vld [vmem:[%s228 + $0x20] sm:$0xff]
        %v273 = vld [vmem:[%s228 + $0x28] sm:$0xff]
        %v274 = vld [vmem:[%s228 + $0x30] sm:$0xff]
        %v275 = vld [vmem:[%s228 + $0x38] sm:$0xff]
        %v276 = vmul.f32 %v260, %v260
        %v277 = vmul.f32 %v261, %v261
        %v278 = vmul.f32 %v262, %v262
        %v279 = vmul.f32 %v263, %v263
        %v280 = vmul.f32 %v264, %v264
        %v281 = vmul.f32 %v265, %v265
        %v282 = vmul.f32 %v266, %v266
        %v283 = vmul.f32 %v267, %v267
        %v284 = vmul.f32 %v268, %v268
        %v285 = vmul.f32 %v269, %v269
        %v286 = vmul.f32 %v270, %v270
        %v287 = vmul.f32 %v271, %v271
        %v288 = vmul.f32 %v272, %v272
        %v289 = vmul.f32 %v273, %v273
        %v290 = vmul.f32 %v274, %v274
        %v291 = vmul.f32 %v275, %v275
        %v292 = vmul.f32 %v260, %v268
        %v293 = vmul.f32 %v261, %v269
        %v294 = vmul.f32 %v262, %v270
        %v295 = vmul.f32 %v263, %v271
        %v296 = vmul.f32 %v264, %v272
        %v297 = vmul.f32 %v265, %v273
        %v298 = vmul.f32 %v266, %v274
        %v299 = vmul.f32 %v267, %v275
        %v300 = vld [vmem:[%s0] sm:$0xff]
        %v301 = vld [vmem:[%s0 + $0x8] sm:$0xff]
        %v302 = vld [vmem:[%s1] sm:$0x3f]
        %vm303 = vcmask 130048
        %v305 = vsel %vm303, %v260, 0
        %v308 = vsel %vm303, %v261, 0
        %v311 = vsel %vm303, %v262, 0
        %v314 = vsel %vm303, %v263, 0
        %v317 = vsel %vm303, %v264, 0
        %v320 = vsel %vm303, %v265, 0
        %v323 = vsel %vm303, %v266, 0
        %v326 = vsel %vm303, %v267, 0
        %v329 = vsel %vm303, %v268, 0
        %v332 = vsel %vm303, %v269, 0
        %v335 = vsel %vm303, %v270, 0
        %v338 = vsel %vm303, %v271, 0
        %v341 = vsel %vm303, %v272, 0
        %v344 = vsel %vm303, %v273, 0
        %v347 = vsel %vm303, %v274, 0
        %v350 = vsel %vm303, %v275, 0
        %v353 = vsel %vm303, %v276, 0
        %v356 = vsel %vm303, %v277, 0
        %v359 = vsel %vm303, %v278, 0
        %v362 = vsel %vm303, %v279, 0
        %v365 = vsel %vm303, %v280, 0
        %v368 = vsel %vm303, %v281, 0
        %v371 = vsel %vm303, %v282, 0
        %v374 = vsel %vm303, %v283, 0
        %v377 = vsel %vm303, %v284, 0
        %v380 = vsel %vm303, %v285, 0
        %v383 = vsel %vm303, %v286, 0
        %v386 = vsel %vm303, %v287, 0
        %v389 = vsel %vm303, %v288, 0
        %v392 = vsel %vm303, %v289, 0
        %v395 = vsel %vm303, %v290, 0
        %v398 = vsel %vm303, %v291, 0
        %v401 = vsel %vm303, %v292, 0
        %v404 = vsel %vm303, %v293, 0
        %v407 = vsel %vm303, %v294, 0
        %v410 = vsel %vm303, %v295, 0
        %v413 = vsel %vm303, %v296, 0
        %v416 = vsel %vm303, %v297, 0
        %v419 = vsel %vm303, %v298, 0
        %v422 = vsel %vm303, %v299, 0
        %424 = vmatprep.subr.mxu0 0.0
        %425 = vmatpush1.msra.mxu0 0.0
        %426 = vmatprep.subr.mxu0 0.0
        %427 = vmatpush1.msra.mxu0 0.0
        %428 = vmatprep.subr.mxu0 0.0
        %429 = vmatpush1.msra.mxu0 0.0
        %430 = vmatprep.subr.mxu0 0.0
        %431 = vmatpush1.msra.mxu0 0.0
        %432 = vmatprep.subr.mxu0 0.0
        %433 = vmatpush1.msra.mxu0 0.0
        %434 = vmatprep.subr.mxu0 0.0
        %435 = vmatpush1.msra.mxu0 0.0
        %436 = vmatprep.subr.mxu0 0.0
        %437 = vmatpush1.msra.mxu0 0.0
        %438 = vmatprep.subr.mxu0 0.0
        %439 = vmatpush1.msra.mxu0 0.0
        %440 = vmatprep.subr.mxu0 0.0
        %441 = vmatpush1.msra.mxu0 0.0
        %442 = vmatprep.subr.mxu0 0.0
        %443 = vmatpush1.msra.mxu0 0.0
        %444 = vmatprep.subr.mxu0 0.0
        %445 = vmatpush1.msra.mxu0 0.0
        %446 = vmatprep.subr.mxu0 0.0
        %447 = vmatpush1.msra.mxu0 0.0
        %448 = vmatprep.subr.mxu0 0.0
        %449 = vmatpush1.msra.mxu0 0.0
        %450 = vmatprep.subr.mxu0 0.0
        %451 = vmatpush1.msra.mxu0 0.0
        %452 = vmatprep.subr.mxu0 0.0
        %453 = vmatpush1.msra.mxu0 %v301
        %454 = vmatprep.subr.mxu0 0.0
        %455 = vmatpush1.msra.mxu0 %v300
        %456 = vmatprep.subr.mxu0 0.0
        %457 = vmatpush2.msra.mxu0 0.0
        %458 = vmatprep.subr.mxu0 0.0
        %459 = vmatpush2.msra.mxu0 0.0
        %460 = vmatprep.subr.mxu0 0.0
        %461 = vmatpush2.msra.mxu0 0.0
        %462 = vmatprep.subr.mxu0 0.0
        %463 = vmatpush2.msra.mxu0 0.0
        %464 = vmatprep.subr.mxu0 0.0
        %465 = vmatpush2.msra.mxu0 0.0
        %466 = vmatprep.subr.mxu0 0.0
        %467 = vmatpush2.msra.mxu0 0.0
        %468 = vmatprep.subr.mxu0 0.0
        %469 = vmatpush2.msra.mxu0 0.0
        %470 = vmatprep.subr.mxu0 0.0
        %471 = vmatpush2.msra.mxu0 0.0
        %472 = vmatprep.subr.mxu0 0.0
        %473 = vmatpush2.msra.mxu0 0.0
        %474 = vmatprep.subr.mxu0 0.0
        %475 = vmatpush2.msra.mxu0 0.0
        %476 = vmatprep.subr.mxu0 0.0
        %477 = vmatpush2.msra.mxu0 0.0
        %478 = vmatprep.subr.mxu0 0.0
        %479 = vmatpush2.msra.mxu0 0.0
        %480 = vmatprep.subr.mxu0 0.0
        %481 = vmatpush2.msra.mxu0 0.0
        %482 = vmatprep.subr.mxu0 0.0
        %483 = vmatpush2.msra.mxu0 0.0
        %484 = vmatprep.subr.mxu0 0.0
        %485 = vmatpush2.msra.mxu0 0.0
        %486 = vmatprep.subr.mxu0 0.0
        %487 = vmatpush2.msra.mxu0 0.0
        %488 = vmatprep.mubr.f32.mxu0 0.0
        %489 = vmatmul.mubr.f32.gmra.mxu0 %v305
        %v490 = vpop.f32.mrf.mxu0
        %v491 = vadd.f32 0.0, %v490
        %v492 = vpop.f32.mrf.mxu0
        %493 = vmatprep.mubr.f32.mxu0 0.0
        %494 = vmatmul.mubr.f32.gmra.mxu0 %v308
        %v495 = vpop.f32.mrf.mxu0
        %v496 = vadd.f32 0.0, %v495
        %v497 = vpop.f32.mrf.mxu0
        %498 = vmatprep.mubr.f32.mxu0 0.0
        %499 = vmatmul.mubr.f32.gmra.mxu0 %v311
        %v500 = vpop.f32.mrf.mxu0
        %v501 = vadd.f32 0.0, %v500
        %v502 = vpop.f32.mrf.mxu0
        %503 = vmatprep.mubr.f32.mxu0 0.0
        %504 = vmatmul.mubr.f32.gmra.mxu0 %v314
        %v505 = vpop.f32.mrf.mxu0
        %v506 = vadd.f32 0.0, %v505
        %v507 = vpop.f32.mrf.mxu0
        %508 = vmatprep.mubr.f32.mxu0 0.0
        %509 = vmatmul.mubr.f32.gmra.mxu0 %v317
        %v510 = vpop.f32.mrf.mxu0
        %v511 = vadd.f32 0.0, %v510
        %v512 = vpop.f32.mrf.mxu0
        %513 = vmatprep.mubr.f32.mxu0 0.0
        %514 = vmatmul.mubr.f32.gmra.mxu0 %v320
        %v515 = vpop.f32.mrf.mxu0
        %v516 = vadd.f32 0.0, %v515
        %v517 = vpop.f32.mrf.mxu0
        %518 = vmatprep.mubr.f32.mxu0 0.0
        %519 = vmatmul.mubr.f32.gmra.mxu0 %v323
        %v520 = vpop.f32.mrf.mxu0
        %v521 = vadd.f32 0.0, %v520
        %v522 = vpop.f32.mrf.mxu0
        %523 = vmatprep.mubr.f32.mxu0 0.0
        %524 = vmatmul.mubr.f32.gmra.mxu0 %v326
        %v525 = vpop.f32.mrf.mxu0
        %v526 = vadd.f32 0.0, %v525
        %v527 = vpop.f32.mrf.mxu0
        %528 = vmatprep.mubr.f32.mxu0 0.0
        %529 = vmatmul.mubr.f32.gmra.mxu0 %v329
        %v530 = vpop.f32.mrf.mxu0
        %v531 = vadd.f32 0.0, %v530
        %v532 = vpop.f32.mrf.mxu0
        %533 = vmatprep.mubr.f32.mxu0 0.0
        %534 = vmatmul.mubr.f32.gmra.mxu0 %v332
        %v535 = vpop.f32.mrf.mxu0
        %v536 = vadd.f32 0.0, %v535
        %v537 = vpop.f32.mrf.mxu0
        %538 = vmatprep.mubr.f32.mxu0 0.0
        %539 = vmatmul.mubr.f32.gmra.mxu0 %v335
        %v540 = vpop.f32.mrf.mxu0
        %v541 = vadd.f32 0.0, %v540
        %v542 = vpop.f32.mrf.mxu0
        %543 = vmatprep.mubr.f32.mxu0 0.0
        %544 = vmatmul.mubr.f32.gmra.mxu0 %v338
        %v545 = vpop.f32.mrf.mxu0
        %v546 = vadd.f32 0.0, %v545
        %v547 = vpop.f32.mrf.mxu0
        %548 = vmatprep.mubr.f32.mxu0 0.0
        %549 = vmatmul.mubr.f32.gmra.mxu0 %v341
        %v550 = vpop.f32.mrf.mxu0
        %v551 = vadd.f32 0.0, %v550
        %v552 = vpop.f32.mrf.mxu0
        %553 = vmatprep.mubr.f32.mxu0 0.0
        %554 = vmatmul.mubr.f32.gmra.mxu0 %v344
        %v555 = vpop.f32.mrf.mxu0
        %v556 = vadd.f32 0.0, %v555
        %v557 = vpop.f32.mrf.mxu0
        %558 = vmatprep.mubr.f32.mxu0 0.0
        %559 = vmatmul.mubr.f32.gmra.mxu0 %v347
        %v560 = vpop.f32.mrf.mxu0
        %v561 = vadd.f32 0.0, %v560
        %v562 = vpop.f32.mrf.mxu0
        %563 = vmatprep.mubr.f32.mxu0 0.0
        %564 = vmatmul.mubr.f32.gmra.mxu0 %v350
        %v565 = vpop.f32.mrf.mxu0
        %v566 = vadd.f32 0.0, %v565
        %v567 = vpop.f32.mrf.mxu0
        %568 = vmatprep.mubr.f32.mxu0 0.0
        %569 = vmatmul.mubr.f32.gmra.mxu0 %v353
        %v570 = vpop.f32.mrf.mxu0
        %v571 = vadd.f32 0.0, %v570
        %v572 = vpop.f32.mrf.mxu0
        %573 = vmatprep.mubr.f32.mxu0 0.0
        %574 = vmatmul.mubr.f32.gmra.mxu0 %v356
        %v575 = vpop.f32.mrf.mxu0
        %v576 = vadd.f32 0.0, %v575
        %v577 = vpop.f32.mrf.mxu0
        %578 = vmatprep.mubr.f32.mxu0 0.0
        %579 = vmatmul.mubr.f32.gmra.mxu0 %v359
        %v580 = vpop.f32.mrf.mxu0
        %v581 = vadd.f32 0.0, %v580
        %v582 = vpop.f32.mrf.mxu0
        %583 = vmatprep.mubr.f32.mxu0 0.0
        %584 = vmatmul.mubr.f32.gmra.mxu0 %v362
        %v585 = vpop.f32.mrf.mxu0
        %v586 = vadd.f32 0.0, %v585
        %v587 = vpop.f32.mrf.mxu0
        %588 = vmatprep.mubr.f32.mxu0 0.0
        %589 = vmatmul.mubr.f32.gmra.mxu0 %v365
        %v590 = vpop.f32.mrf.mxu0
        %v591 = vadd.f32 0.0, %v590
        %v592 = vpop.f32.mrf.mxu0
        %593 = vmatprep.mubr.f32.mxu0 0.0
        %594 = vmatmul.mubr.f32.gmra.mxu0 %v368
        %v595 = vpop.f32.mrf.mxu0
        %v596 = vadd.f32 0.0, %v595
        %v597 = vpop.f32.mrf.mxu0
        %598 = vmatprep.mubr.f32.mxu0 0.0
        %599 = vmatmul.mubr.f32.gmra.mxu0 %v371
        %v600 = vpop.f32.mrf.mxu0
        %v601 = vadd.f32 0.0, %v600
        %v602 = vpop.f32.mrf.mxu0
        %603 = vmatprep.mubr.f32.mxu0 0.0
        %604 = vmatmul.mubr.f32.gmra.mxu0 %v374
        %v605 = vpop.f32.mrf.mxu0
        %v606 = vadd.f32 0.0, %v605
        %v607 = vpop.f32.mrf.mxu0
        %608 = vmatprep.mubr.f32.mxu0 0.0
        %609 = vmatmul.mubr.f32.gmra.mxu0 %v377
        %v610 = vpop.f32.mrf.mxu0
        %v611 = vadd.f32 0.0, %v610
        %v612 = vpop.f32.mrf.mxu0
        %613 = vmatprep.mubr.f32.mxu0 0.0
        %614 = vmatmul.mubr.f32.gmra.mxu0 %v380
        %v615 = vpop.f32.mrf.mxu0
        %v616 = vadd.f32 0.0, %v615
        %v617 = vpop.f32.mrf.mxu0
        %618 = vmatprep.mubr.f32.mxu0 0.0
        %619 = vmatmul.mubr.f32.gmra.mxu0 %v383
        %v620 = vpop.f32.mrf.mxu0
        %v621 = vadd.f32 0.0, %v620
        %v622 = vpop.f32.mrf.mxu0
        %623 = vmatprep.mubr.f32.mxu0 0.0
        %624 = vmatmul.mubr.f32.gmra.mxu0 %v386
        %v625 = vpop.f32.mrf.mxu0
        %v626 = vadd.f32 0.0, %v625
        %v627 = vpop.f32.mrf.mxu0
        %628 = vmatprep.mubr.f32.mxu0 0.0
        %629 = vmatmul.mubr.f32.gmra.mxu0 %v389
        %v630 = vpop.f32.mrf.mxu0
        %v631 = vadd.f32 0.0, %v630
        %v632 = vpop.f32.mrf.mxu0
        %633 = vmatprep.mubr.f32.mxu0 0.0
        %634 = vmatmul.mubr.f32.gmra.mxu0 %v392
        %v635 = vpop.f32.mrf.mxu0
        %v636 = vadd.f32 0.0, %v635
        %v637 = vpop.f32.mrf.mxu0
        %638 = vmatprep.mubr.f32.mxu0 0.0
        %639 = vmatmul.mubr.f32.gmra.mxu0 %v395
        %v640 = vpop.f32.mrf.mxu0
        %v641 = vadd.f32 0.0, %v640
        %v642 = vpop.f32.mrf.mxu0
        %643 = vmatprep.mubr.f32.mxu0 0.0
        %644 = vmatmul.mubr.f32.gmra.mxu0 %v398
        %v645 = vpop.f32.mrf.mxu0
        %v646 = vadd.f32 0.0, %v645
        %v647 = vpop.f32.mrf.mxu0
        %648 = vmatprep.mubr.f32.mxu0 0.0
        %649 = vmatmul.mubr.f32.gmra.mxu0 %v401
        %v650 = vpop.f32.mrf.mxu0
        %v651 = vadd.f32 0.0, %v650
        %v652 = vpop.f32.mrf.mxu0
        %653 = vmatprep.mubr.f32.mxu0 0.0
        %654 = vmatmul.mubr.f32.gmra.mxu0 %v404
        %v655 = vpop.f32.mrf.mxu0
        %v656 = vadd.f32 0.0, %v655
        %v657 = vpop.f32.mrf.mxu0
        %658 = vmatprep.mubr.f32.mxu0 0.0
        %659 = vmatmul.mubr.f32.gmra.mxu0 %v407
        %v660 = vpop.f32.mrf.mxu0
        %v661 = vadd.f32 0.0, %v660
        %v662 = vpop.f32.mrf.mxu0
        %663 = vmatprep.mubr.f32.mxu0 0.0
        %664 = vmatmul.mubr.f32.gmra.mxu0 %v410
        %v665 = vpop.f32.mrf.mxu0
        %v666 = vadd.f32 0.0, %v665
        %v667 = vpop.f32.mrf.mxu0
        %668 = vmatprep.mubr.f32.mxu0 0.0
        %669 = vmatmul.mubr.f32.gmra.mxu0 %v413
        %v670 = vpop.f32.mrf.mxu0
        %v671 = vadd.f32 0.0, %v670
        %v672 = vpop.f32.mrf.mxu0
        %673 = vmatprep.mubr.f32.mxu0 0.0
        %674 = vmatmul.mubr.f32.gmra.mxu0 %v416
        %v675 = vpop.f32.mrf.mxu0
        %v676 = vadd.f32 0.0, %v675
        %v677 = vpop.f32.mrf.mxu0
        %678 = vmatprep.mubr.f32.mxu0 0.0
        %679 = vmatmul.mubr.f32.gmra.mxu0 %v419
        %v680 = vpop.f32.mrf.mxu0
        %v681 = vadd.f32 0.0, %v680
        %v682 = vpop.f32.mrf.mxu0
        %683 = vmatprep.mubr.f32.mxu0 0.0
        %684 = vmatmul.mubr.f32.gmra.mxu0 %v422
        %v685 = vpop.f32.mrf.mxu0
        %v686 = vadd.f32 0.0, %v685
        %v687 = vpop.f32.mrf.mxu0
        %688 = vdwg.mxu0
        %vm689 = vcmask 48128
        %690 = vst.msk [vmem:[#allocation2] sm:$0xff] %vm689, %v491
        %691 = vst.msk [vmem:[#allocation2 + $0x8] sm:$0xff] %vm689, %v496
        %694 = vrot.lane.b32.xlu0 %v501, 6
        %v695 = vpop.permute.xlu0 %694
        %696 = vrot.lane.b32.xlu0 %v506, 6
        %v697 = vpop.permute.xlu0 %696
        %vm700 = vcmask 97328
        %701 = vst.msk [vmem:[#allocation2] sm:$0xff] %vm700, %v695
        %702 = vst.msk [vmem:[#allocation2 + $0x8] sm:$0xff] %vm700, %v697
        %705 = vrot.lane.b32.xlu0 %v511, 12
        %v706 = vpop.permute.xlu0 %705
        %707 = vrot.lane.b32.xlu0 %v516, 12
        %v708 = vpop.permute.xlu0 %707
        %vm711 = vcmask 146528
        %712 = vst.msk [vmem:[#allocation2] sm:$0xff] %vm711, %v706
        %713 = vst.msk [vmem:[#allocation2 + $0x8] sm:$0xff] %vm711, %v708
        %716 = vrot.lane.b32.xlu0 %v521, 18
        %v717 = vpop.permute.xlu0 %716
        %718 = vrot.lane.b32.xlu0 %v526, 18
        %v719 = vpop.permute.xlu0 %718
        %vm722 = vcmask 195728
        %723 = vst.msk [vmem:[#allocation2] sm:$0xff] %vm722, %v717
        %724 = vst.msk [vmem:[#allocation2 + $0x8] sm:$0xff] %vm722, %v719
        %727 = vrot.lane.b32.xlu0 %v531, 24
        %v728 = vpop.permute.xlu0 %727
        %729 = vrot.lane.b32.xlu0 %v536, 24
        %v730 = vpop.permute.xlu0 %729
        %vm733 = vcmask 244928
        %734 = vst.msk [vmem:[#allocation2] sm:$0xff] %vm733, %v728
        %735 = vst.msk [vmem:[#allocation2 + $0x8] sm:$0xff] %vm733, %v730
        %738 = vrot.lane.b32.xlu0 %v541, 30
        %v739 = vpop.permute.xlu0 %738
        %740 = vrot.lane.b32.xlu0 %v546, 30
        %v741 = vpop.permute.xlu0 %740
        %vm744 = vcmask 294128
        %745 = vst.msk [vmem:[#allocation2] sm:$0xff] %vm744, %v739
        %746 = vst.msk [vmem:[#allocation2 + $0x8] sm:$0xff] %vm744, %v741
        %749 = vrot.lane.b32.xlu0 %v551, 36
        %v750 = vpop.permute.xlu0 %749
        %751 = vrot.lane.b32.xlu0 %v556, 36
        %v752 = vpop.permute.xlu0 %751
        %vm755 = vcmask 343328
        %756 = vst.msk [vmem:[#allocation2] sm:$0xff] %vm755, %v750
        %757 = vst.msk [vmem:[#allocation2 + $0x8] sm:$0xff] %vm755, %v752
        %760 = vrot.lane.b32.xlu0 %v561, 42
        %v761 = vpop.permute.xlu0 %760
        %762 = vrot.lane.b32.xlu0 %v566, 42
        %v763 = vpop.permute.xlu0 %762
        %vm766 = vcmask 392528
        %767 = vst.msk [vmem:[#allocation2] sm:$0xff] %vm766, %v761
        %768 = vst.msk [vmem:[#allocation2 + $0x8] sm:$0xff] %vm766, %v763
        %771 = vrot.lane.b32.xlu0 %v571, 48
        %v772 = vpop.permute.xlu0 %771
        %773 = vrot.lane.b32.xlu0 %v576, 48
        %v774 = vpop.permute.xlu0 %773
        %vm777 = vcmask 441728
        %778 = vst.msk [vmem:[#allocation2] sm:$0xff] %vm777, %v772
        %779 = vst.msk [vmem:[#allocation2 + $0x8] sm:$0xff] %vm777, %v774
        %782 = vrot.lane.b32.xlu0 %v581, 54
        %v783 = vpop.permute.xlu0 %782
        %784 = vrot.lane.b32.xlu0 %v586, 54
        %v785 = vpop.permute.xlu0 %784
        %vm788 = vcmask 490928
        %789 = vst.msk [vmem:[#allocation2] sm:$0xff] %vm788, %v783
        %790 = vst.msk [vmem:[#allocation2 + $0x8] sm:$0xff] %vm788, %v785
        %793 = vrot.lane.b32.xlu0 %v591, 60
        %v794 = vpop.permute.xlu0 %793
        %795 = vrot.lane.b32.xlu0 %v596, 60
        %v796 = vpop.permute.xlu0 %795
        %vm799 = vcmask 540128
        %800 = vst.msk [vmem:[#allocation2] sm:$0xff] %vm799, %v794
        %801 = vst.msk [vmem:[#allocation2 + $0x8] sm:$0xff] %vm799, %v796
        %804 = vrot.lane.b32.xlu0 %v601, 66
        %v805 = vpop.permute.xlu0 %804
        %806 = vrot.lane.b32.xlu0 %v606, 66
        %v807 = vpop.permute.xlu0 %806
        %vm810 = vcmask 589328
        %811 = vst.msk [vmem:[#allocation2] sm:$0xff] %vm810, %v805
        %812 = vst.msk [vmem:[#allocation2 + $0x8] sm:$0xff] %vm810, %v807
        %815 = vrot.lane.b32.xlu0 %v611, 72
        %v816 = vpop.permute.xlu0 %815
        %817 = vrot.lane.b32.xlu0 %v616, 72
        %v818 = vpop.permute.xlu0 %817
        %vm821 = vcmask 638528
        %822 = vst.msk [vmem:[#allocation2] sm:$0xff] %vm821, %v816
        %823 = vst.msk [vmem:[#allocation2 + $0x8] sm:$0xff] %vm821, %v818
        %826 = vrot.lane.b32.xlu0 %v621, 78
        %v827 = vpop.permute.xlu0 %826
        %828 = vrot.lane.b32.xlu0 %v626, 78
        %v829 = vpop.permute.xlu0 %828
        %vm832 = vcmask 687728
        %833 = vst.msk [vmem:[#allocation2] sm:$0xff] %vm832, %v827
        %834 = vst.msk [vmem:[#allocation2 + $0x8] sm:$0xff] %vm832, %v829
        %837 = vrot.lane.b32.xlu0 %v631, 84
        %v838 = vpop.permute.xlu0 %837
        %839 = vrot.lane.b32.xlu0 %v636, 84
        %v840 = vpop.permute.xlu0 %839
        %vm843 = vcmask 736928
        %844 = vst.msk [vmem:[#allocation2] sm:$0xff] %vm843, %v838
        %845 = vst.msk [vmem:[#allocation2 + $0x8] sm:$0xff] %vm843, %v840
        %848 = vrot.lane.b32.xlu0 %v641, 90
        %v849 = vpop.permute.xlu0 %848
        %850 = vrot.lane.b32.xlu0 %v646, 90
        %v851 = vpop.permute.xlu0 %850
        %vm854 = vcmask 786128
        %855 = vst.msk [vmem:[#allocation2] sm:$0xff] %vm854, %v849
        %856 = vst.msk [vmem:[#allocation2 + $0x8] sm:$0xff] %vm854, %v851
        %859 = vrot.lane.b32.xlu0 %v651, 96
        %v860 = vpop.permute.xlu0 %859
        %861 = vrot.lane.b32.xlu0 %v656, 96
        %v862 = vpop.permute.xlu0 %861
        %vm865 = vcmask 835328
        %866 = vst.msk [vmem:[#allocation2] sm:$0xff] %vm865, %v860
        %867 = vst.msk [vmem:[#allocation2 + $0x8] sm:$0xff] %vm865, %v862
        %870 = vrot.lane.b32.xlu0 %v661, 102
        %v871 = vpop.permute.xlu0 %870
        %872 = vrot.lane.b32.xlu0 %v666, 102
        %v873 = vpop.permute.xlu0 %872
        %vm876 = vcmask 884528
        %877 = vst.msk [vmem:[#allocation2] sm:$0xff] %vm876, %v871
        %878 = vst.msk [vmem:[#allocation2 + $0x8] sm:$0xff] %vm876, %v873
        %881 = vrot.lane.b32.xlu0 %v671, 108
        %v882 = vpop.permute.xlu0 %881
        %883 = vrot.lane.b32.xlu0 %v676, 108
        %v884 = vpop.permute.xlu0 %883
        %vm887 = vcmask 933728
        %888 = vst.msk [vmem:[#allocation2] sm:$0xff] %vm887, %v882
        %889 = vst.msk [vmem:[#allocation2 + $0x8] sm:$0xff] %vm887, %v884
        %892 = vrot.lane.b32.xlu0 %v681, 114
        %v893 = vpop.permute.xlu0 %892
        %894 = vrot.lane.b32.xlu0 %v686, 114
        %v895 = vpop.permute.xlu0 %894
        %vm898 = vcmask 982928
        %899 = vst.msk [vmem:[#allocation2] sm:$0xff] %vm898, %v893
        %900 = vst.msk [vmem:[#allocation2 + $0x8] sm:$0xff] %vm898, %v895
        %v901 = vld [vmem:[#allocation2] sm:$0xff]
        %v902 = vld [vmem:[#allocation2 + $0x8] sm:$0xff]
        %v904 = vsel %vm303, %v302, 0
        %906 = vmatprep.subr.mxu0 0.0
        %907 = vmatpush1.msra.mxu0 0.0
        %908 = vmatprep.subr.mxu0 0.0
        %909 = vmatpush1.msra.mxu0 0.0
        %910 = vmatprep.subr.mxu0 0.0
        %911 = vmatpush1.msra.mxu0 0.0
        %912 = vmatprep.subr.mxu0 0.0
        %913 = vmatpush1.msra.mxu0 0.0
        %914 = vmatprep.subr.mxu0 0.0
        %915 = vmatpush1.msra.mxu0 0.0
        %916 = vmatprep.subr.mxu0 0.0
        %917 = vmatpush1.msra.mxu0 0.0
        %918 = vmatprep.subr.mxu0 0.0
        %919 = vmatpush1.msra.mxu0 0.0
        %920 = vmatprep.subr.mxu0 0.0
        %921 = vmatpush1.msra.mxu0 0.0
        %922 = vmatprep.subr.mxu0 0.0
        %923 = vmatpush1.msra.mxu0 0.0
        %924 = vmatprep.subr.mxu0 0.0
        %925 = vmatpush1.msra.mxu0 0.0
        %926 = vmatprep.subr.mxu0 0.0
        %927 = vmatpush1.msra.mxu0 0.0
        %928 = vmatprep.subr.mxu0 0.0
        %929 = vmatpush1.msra.mxu0 0.0
        %930 = vmatprep.subr.mxu0 0.0
        %931 = vmatpush1.msra.mxu0 0.0
        %932 = vmatprep.subr.mxu0 0.0
        %933 = vmatpush1.msra.mxu0 0.0
        %934 = vmatprep.subr.mxu0 0.0
        %935 = vmatpush1.msra.mxu0 %v902
        %936 = vmatprep.subr.mxu0 0.0
        %937 = vmatpush1.msra.mxu0 %v901
        %938 = vmatprep.subr.mxu0 0.0
        %939 = vmatpush2.msra.mxu0 0.0
        %940 = vmatprep.subr.mxu0 0.0
        %941 = vmatpush2.msra.mxu0 0.0
        %942 = vmatprep.subr.mxu0 0.0
        %943 = vmatpush2.msra.mxu0 0.0
        %944 = vmatprep.subr.mxu0 0.0
        %945 = vmatpush2.msra.mxu0 0.0
        %946 = vmatprep.subr.mxu0 0.0
        %947 = vmatpush2.msra.mxu0 0.0
        %948 = vmatprep.subr.mxu0 0.0
        %949 = vmatpush2.msra.mxu0 0.0
        %950 = vmatprep.subr.mxu0 0.0
        %951 = vmatpush2.msra.mxu0 0.0
        %952 = vmatprep.subr.mxu0 0.0
        %953 = vmatpush2.msra.mxu0 0.0
        %954 = vmatprep.subr.mxu0 0.0
        %955 = vmatpush2.msra.mxu0 0.0
        %956 = vmatprep.subr.mxu0 0.0
        %957 = vmatpush2.msra.mxu0 0.0
        %958 = vmatprep.subr.mxu0 0.0
        %959 = vmatpush2.msra.mxu0 0.0
        %960 = vmatprep.subr.mxu0 0.0
        %961 = vmatpush2.msra.mxu0 0.0
        %962 = vmatprep.subr.mxu0 0.0
        %963 = vmatpush2.msra.mxu0 0.0
        %964 = vmatprep.subr.mxu0 0.0
        %965 = vmatpush2.msra.mxu0 0.0
        %966 = vmatprep.subr.mxu0 0.0
        %967 = vmatpush2.msra.mxu0 0.0
        %968 = vmatprep.subr.mxu0 0.0
        %969 = vmatpush2.msra.mxu0 0.0
        %970 = vmatprep.mubr.f32.mxu0 0.0
        %971 = vmatmul.mubr.f32.gmra.mxu0 %v904
        %v972 = vpop.f32.mrf.mxu0
        %v973 = vadd.f32 0.0, %v972
        %v974 = vpop.f32.mrf.mxu0
        %975 = vdwg.mxu0
        %v976 = vmul.f32 %v973, %v973
        %978 = vrot.lane.b32.xlu0 %v973, 104
        %v979 = vpop.permute.xlu0 %978
        %v981 = vmul.f32 %v973, %v979
        %983 = vrot.lane.b32.xlu0 %v976, 48
        %v984 = vpop.permute.xlu0 %983
        %v986 = vsub.f32 %v973, %v984
        %988 = vrot.lane.b32.xlu0 %v981, 96
        %v989 = vpop.permute.xlu0 %988
        %v991 = vsub.f32 %v973, %v989
        %v992 = vmul.f32 %v981, 2.0
        %v993 = vadd.f32 %v992, 0.0001
        %v994 = vmul.f32 %v991, 2.0
        %v995 = vadd.f32 %v994, 0.0009
        %997 = vrot.lane.b32.xlu0 %v995, 32
        %v998 = vpop.permute.xlu0 %997
        %v1000 = vmul.f32 %v993, %v998
        %1001 = vrot.lane.b32.xlu0 %v976, 104
        %v1002 = vpop.permute.xlu0 %1001
        %v1004 = vadd.f32 %v976, %v1002
        %v1005 = vadd.f32 %v1004, 0.0001
        %1007 = vrot.lane.b32.xlu0 %v986, 104
        %v1008 = vpop.permute.xlu0 %1007
        %v1010 = vadd.f32 %v986, %v1008
        %v1011 = vadd.f32 %v1010, 0.0009
        %1013 = vrot.lane.b32.xlu0 %v1011, 80
        %v1014 = vpop.permute.xlu0 %1013
        %v1016 = vmul.f32 %v1005, %v1014
        %v1017 = vrcp.pop %v1016
        %v1018 = vmul.f32 %v1000, %v1017
        %vm1019 = vcmask 193536
        %v1020 = vsel %vm1019, %v1018, 0.0
        %1021 = vadd.xlane.f32.xlu0 %v1020
        %v1022 = vpop.xlane.xlu0 %1021
        %v1023 = vrot.slane %v1022, 4
        %v1024 = vadd.f32 %v1022, %v1023
        %v1025 = vrot.slane %v1024, 2
        %v1026 = vadd.f32 %v1024, %v1025
        %v1027 = vrot.slane %v1026, 1
        %v1028 = vadd.f32 %v1026, %v1027
        %s1029 = vtos %v1028
        %s1030 = smul.f32 %s1029, 0.0069444445
        %v1031 = vstv %s1030
        %1032 = vst [vmem:[%s257] sm:$0xff] %v1031
        %s1033 = sand.u32 %s126, 1
        %s1034 = scalar_lea.sflag [#allocation5], %s1033
        %s1035 = sand.u32 %s126, 1
        %s1036 = smul.addr %s1035, 8
        %s1037 = scalar_lea.vmem [#allocation8], %s1036
        // Predicated region
        $region45: #{tpu_custom_call.1} parent=35 // pred_check
          %p1038 = pneg %p136
        $region46: #{tpu_custom_call.1} parent=35 // pred_check_branch
          %1040 = sbr.rel (%p1038) target = $region48
        $region47: #{tpu_custom_call.1} parent=35 // pred_region
          %s1042 = ssub.s32 128, 128
          %1043 = vsyncadd %s1034, %s1042
          %s1044 = smul.addr %s24, 128
          %s1045 = scalar_lea.hbm %s4, %s1044
          %s1047 = sshll.u32 %s1037, 4
          %s1048 = int_to_ptr.vmem [resolvable:$true] %s1047
          %1050 = dma.vmem_to_hbm [thread:$0]  %s1048, 128, %s1045, %s1034
        $region48: #{tpu_custom_call.1} parent=35 // pred_fallthru
          _
      $region36: #{tpu_custom_call.1} parent=5 // pred_fallthru
        _
      %p1051 = scmp.le.s32.totalorder 2, %s19
      // Predicated region
      $region49: #{tpu_custom_call.1} parent=5 // pred_check
        %p1052 = pneg %p1051
      $region50: #{tpu_custom_call.1} parent=5 // pred_check_branch
        %1054 = sbr.rel (%p1052) target = $region52
      $region51: #{tpu_custom_call.1} parent=5 // pred_region
        %s1055 = ssub.s32 %s19, 2
        // Predicated region
        $region53: #{tpu_custom_call.1} parent=51 // pred_check
          %p1056 = pneg %p142
        $region54: #{tpu_custom_call.1} parent=51 // pred_check_branch
          %1058 = sbr.rel (%p1056) target = $region56
        $region55: #{tpu_custom_call.1} parent=51 // pred_region
          %s1059 = sand.u32 %s127, 1
          %s1060 = scalar_lea.sflag [#allocation5], %s1059
          %s1061 = sand.u32 %s127, 1
          %s1062 = smul.addr %s1061, 8
          %s1063 = scalar_lea.vmem [#allocation8], %s1062
          %1064 = dma.done %s1060, 128
        $region56: #{tpu_custom_call.1} parent=51 // pred_fallthru
          _
      $region52: #{tpu_custom_call.1} parent=5 // pred_fallthru
        _
    $region6: #{tpu_custom_call.1} parent=1 // loop_footer
      %s23 = sadd.s32 1, %s19
    $region7: #{tpu_custom_call.1} parent=1 // loop_footer_branch
      %18 = sbr.rel target = $region3
    $region8: #{tpu_custom_call.1} parent=1 // loop_exit
      _
    %1065 = vsyncpa [#allocation4], 1
    %s1066 = scalar_lea.sflag [#allocation4], 1
    %1067 = vsyncpa %s1066, 1
    %1068 = vsyncpa [#allocation7], 1
    %s1069 = scalar_lea.sflag [#allocation7], 1
    %1070 = vsyncpa %s1069, 1
    %1071 = vsyncpa [#allocation5], 1
    %s1072 = scalar_lea.sflag [#allocation5], 1
    %1073 = vsyncpa %s1072, 1

</llo_original>
